<compile_context>
chip_gen: v7x
topology: tpu7x:2x2x1
jax: 0.10.0
libtpu: 0.0.40
codegen_flags: <defaults>
</compile_context>

<pallas_src>
import jax
import jax.numpy as jnp
from jax import lax
from jax.experimental import pallas as pl
from jax.experimental.pallas import tpu as pltpu


def _global_path_kernel(p_ref, wa_ref, wb_ref, ba_ref, bb_ref, mask_ref, o_ref):
    """One M-tile of flattened (batch*spatial) rows per grid step.

    p_ref    : (tm, K)    VMEM  im2col patches, K = KH*KW*Cin
    wa_ref   : (K, Cout)  VMEM  first maxout piece of the weight
    wb_ref   : (K, Cout)  VMEM  second maxout piece of the weight
    ba_ref   : (1, Cout)  VMEM  bias, first piece
    bb_ref   : (1, Cout)  VMEM  bias, second piece
    mask_ref : (tm, Cout) VMEM  Dropout2d scale mask (0 or 1/(1-p)) per row
    o_ref    : (tm, Cout) VMEM
    """
    p = p_ref[...]                                             # (tm, K)

    # Two lane-aligned (K x Cout) matmuls, f32 accumulation on the MXU.
    a = jnp.dot(p, wa_ref[...], preferred_element_type=jnp.float32) + ba_ref[...]
    b = jnp.dot(p, wb_ref[...], preferred_element_type=jnp.float32) + bb_ref[...]

    # Maxout over the two pieces (pure VPU max, matching layouts), then the
    # fused Dropout2d channel scale.
    o_ref[...] = (jnp.maximum(a, b) * mask_ref[...]).astype(o_ref.dtype)


def _im2col(x_nhwc, kh, kw):
    """(N,H,W,Cin) -> (N, OH*OW, KH*KW*Cin), flatten order (kh, kw, cin)."""
    n, h, w, cin = x_nhwc.shape
    oh, ow = h - kh + 1, w - kw + 1
    rows = []
    for i in range(kh):
        cols = [x_nhwc[:, i:i + oh, j:j + ow, :] for j in range(kw)]
        rows.append(jnp.stack(cols, axis=3))                   # (N,OH,OW,KW,Cin)
    patches = jnp.stack(rows, axis=3)                          # (N,OH,OW,KH,KW,Cin)
    return patches.reshape(n, oh * ow, kh * kw * cin)


def _round_up(x, m):
    return (x + m - 1) // m * m


def global_path_cnn_forward(x_nchw, weight_hwio, bias, drop_mask):
    """x_nchw: (N, Cin, H, W) f32.  Returns (N, Cout, OH, OW) f32 (NCHW)."""
    n, cin, h, w = x_nchw.shape
    kh, kw, cin_w, cout2 = weight_hwio.shape
    assert cin_w == cin
    cout = cout2 // 2
    oh, ow = h - kh + 1, w - kw + 1
    k = kh * kw * cin
    m = n * oh * ow

    # Wrapper-side layout work: NCHW -> NHWC -> lane-dense im2col patches with
    # batch and spatial flattened into one M axis.
    x_nhwc = jnp.transpose(x_nchw, (0, 2, 3, 1))               # (N, H, W, Cin)
    patches = _im2col(x_nhwc, kh, kw).reshape(m, k)            # (M, K)

    # Weight flattened to (K, 2*Cout) and split into two lane-aligned pieces.
    w_flat = weight_hwio.reshape(k, cout2)
    wa = w_flat[:, :cout]                                      # (K, Cout)
    wb = w_flat[:, cout:]                                      # (K, Cout)
    ba = bias[:cout].reshape(1, cout)
    bb = bias[cout:].reshape(1, cout)

    # Dropout2d mask, broadcast per sample over its OH*OW rows.
    mask_rows = jnp.broadcast_to(
        drop_mask.reshape(n, 1, cout), (n, oh * ow, cout)).reshape(m, cout)

    # Row tile: multiple of 8 sublanes, capped so double-buffered patch tiles
    # stay well inside VMEM even for larger problems; zero-pad M to a multiple.
    tm = min(512, _round_up(m, 8))
    m_pad = _round_up(m, tm)
    if m_pad != m:
        patches = jnp.pad(patches, ((0, m_pad - m), (0, 0)))
        mask_rows = jnp.pad(mask_rows, ((0, m_pad - m), (0, 0)))

    out = pl.pallas_call(
        _global_path_kernel,
        out_shape=jax.ShapeDtypeStruct((m_pad, cout), jnp.float32),
        grid_spec=pltpu.PrefetchScalarGridSpec(
            num_scalar_prefetch=0,
            grid=(m_pad // tm,),
            in_specs=[
                pl.BlockSpec((tm, k), lambda i: (i, 0)),        # patches
                pl.BlockSpec((k, cout), lambda i: (0, 0)),      # wa (resident)
                pl.BlockSpec((k, cout), lambda i: (0, 0)),      # wb (resident)
                pl.BlockSpec((1, cout), lambda i: (0, 0)),      # ba
                pl.BlockSpec((1, cout), lambda i: (0, 0)),      # bb
                pl.BlockSpec((tm, cout), lambda i: (i, 0)),     # dropout mask
            ],
            out_specs=pl.BlockSpec((tm, cout), lambda i: (i, 0)),
        ),
        compiler_params=pltpu.CompilerParams(
            dimension_semantics=("parallel",)),
    )(patches, wa, wb, ba, bb, mask_rows)

    # (M_pad, Cout) -> (N, OH, OW, Cout) -> NCHW
    out = out[:m].reshape(n, oh, ow, cout)
    return jnp.transpose(out, (0, 3, 1, 2))


def _reference(x_nchw, weight_hwio, bias, drop_mask):
    """Pure-JAX reference (NHWC conv -> maxout -> channel dropout)."""
    cout = weight_hwio.shape[-1] // 2
    x_nhwc = jnp.transpose(x_nchw, (0, 2, 3, 1))
    conv = lax.conv_general_dilated(
        x_nhwc, weight_hwio, window_strides=(1, 1), padding="VALID",
        dimension_numbers=("NHWC", "HWIO", "NHWC"))
    conv = conv + bias.reshape(1, 1, 1, -1)
    maxed = jnp.maximum(conv[..., :cout], conv[..., cout:])
    dropped = maxed * drop_mask[:, None, None, :]
    return jnp.transpose(dropped, (0, 3, 1, 2))


if __name__ == "__main__":
    # Small shapes consistent with the module: kernel_size=13 -> spatial 16
    # gives a 4x4 output; out_channels fixed at 160 by GlobalPathCNN.
    N, CIN, H, W = 2, 4, 16, 16
    COUT = 160
    KH = KW = 13
    DROPOUT_P = 0.25

    key = jax.random.PRNGKey(0)
    kx, kw_, kb, kd = jax.random.split(key, 4)

    x = jax.random.normal(kx, (N, CIN, H, W), dtype=jnp.float32)
    # Conv2d(in, 2*160, 13) parameters, deterministic init (HWIO layout).
    weight = jax.random.normal(kw_, (KH, KW, CIN, 2 * COUT), dtype=jnp.float32) * 0.05
    bias = jax.random.normal(kb, (2 * COUT,), dtype=jnp.float32) * 0.01

    # Dropout2d training-mode mask: per-(sample, channel) keep / (1 - p).
    # TODO(synk): module's RNG state is not reproducible here; eval mode is an
    # all-ones mask passed from the wrapper.
    keep = jax.random.bernoulli(kd, 1.0 - DROPOUT_P, (N, COUT))
    drop_mask = keep.astype(jnp.float32) / (1.0 - DROPOUT_P)

    out = global_path_cnn_forward(x, weight, bias, drop_mask)
    out = jax.block_until_ready(out)

    ref = _reference(x, weight, bias, drop_mask)
    assert out.shape == (N, COUT, H - KH + 1, W - KW + 1), out.shape
    assert jnp.allclose(out, ref, rtol=5e-3, atol=5e-3), (
        float(jnp.max(jnp.abs(out - ref))))

    print("KERNEL_OK")
</pallas_src>

<mosaic_0001>
module attributes {stable_mosaic.version = 11 : i64} {
  func.func @_global_path_kernel(%arg0: i32, %arg1: memref<32x676xf32, #tpu.memory_space<vmem>>, %arg2: memref<676x160xf32, #tpu.memory_space<vmem>>, %arg3: memref<676x160xf32, #tpu.memory_space<vmem>>, %arg4: memref<1x160xf32, #tpu.memory_space<vmem>>, %arg5: memref<1x160xf32, #tpu.memory_space<vmem>>, %arg6: memref<32x160xf32, #tpu.memory_space<vmem>>, %arg7: memref<32x160xf32, #tpu.memory_space<vmem>>) attributes {dimension_semantics = [#tpu.dimension_semantics<parallel>], iteration_bounds = array<i64: 1>, scalar_prefetch = 0 : i64, scratch_operands = 0 : i64, tpu.core_type = #tpu.core_type<tc>, window_params = [{transform_indices = @transform_0, window_bounds = array<i64: 32, 676>}, {pipeline_mode = #tpu.pipeline_mode<synchronous>, transform_indices = @transform_1, window_bounds = array<i64: 676, 160>}, {pipeline_mode = #tpu.pipeline_mode<synchronous>, transform_indices = @transform_2, window_bounds = array<i64: 676, 160>}, {pipeline_mode = #tpu.pipeline_mode<synchronous>, transform_indices = @transform_3, window_bounds = array<i64: 1, 160>}, {pipeline_mode = #tpu.pipeline_mode<synchronous>, transform_indices = @transform_4, window_bounds = array<i64: 1, 160>}, {transform_indices = @transform_5, window_bounds = array<i64: 32, 160>}, {transform_indices = @transform_6, window_bounds = array<i64: 32, 160>}]} {
    %c0 = arith.constant 0 : index
    %c0_0 = arith.constant 0 : index
    %0 = vector.load %arg1[%c0, %c0_0] : memref<32x676xf32, #tpu.memory_space<vmem>>, vector<32x676xf32>
    %c0_1 = arith.constant 0 : index
    %c0_2 = arith.constant 0 : index
    %1 = vector.load %arg2[%c0_1, %c0_2] : memref<676x160xf32, #tpu.memory_space<vmem>>, vector<676x160xf32>
    %cst = arith.constant dense<0.000000e+00> : vector<32x160xf32>
    %2 = tpu.matmul %0, %1, %cst {dimension_numbers = #tpu.dot_dimension_numbers<[1], [0], [0], [1], [0, 0, 1, 1], [], []>} : vector<32x676xf32>, vector<676x160xf32>, vector<32x160xf32> -> vector<32x160xf32>
    %c0_3 = arith.constant 0 : index
    %c0_4 = arith.constant 0 : index
    %3 = vector.load %arg4[%c0_3, %c0_4] : memref<1x160xf32, #tpu.memory_space<vmem>>, vector<1x160xf32>
    %4 = vector.broadcast %3 : vector<1x160xf32> to vector<32x160xf32>
    %5 = arith.addf %2, %4 : vector<32x160xf32>
    %c0_5 = arith.constant 0 : index
    %c0_6 = arith.constant 0 : index
    %6 = vector.load %arg3[%c0_5, %c0_6] : memref<676x160xf32, #tpu.memory_space<vmem>>, vector<676x160xf32>
    %cst_7 = arith.constant dense<0.000000e+00> : vector<32x160xf32>
    %7 = tpu.matmul %0, %6, %cst_7 {dimension_numbers = #tpu.dot_dimension_numbers<[1], [0], [0], [1], [0, 0, 1, 1], [], []>} : vector<32x676xf32>, vector<676x160xf32>, vector<32x160xf32> -> vector<32x160xf32>
    %c0_8 = arith.constant 0 : index
    %c0_9 = arith.constant 0 : index
    %8 = vector.load %arg5[%c0_8, %c0_9] : memref<1x160xf32, #tpu.memory_space<vmem>>, vector<1x160xf32>
    %9 = vector.broadcast %8 : vector<1x160xf32> to vector<32x160xf32>
    %10 = arith.addf %7, %9 : vector<32x160xf32>
    %11 = arith.maximumf %5, %10 : vector<32x160xf32>
    %c0_10 = arith.constant 0 : index
    %c0_11 = arith.constant 0 : index
    %12 = vector.load %arg6[%c0_10, %c0_11] : memref<32x160xf32, #tpu.memory_space<vmem>>, vector<32x160xf32>
    %13 = arith.mulf %11, %12 : vector<32x160xf32>
    %c0_12 = arith.constant 0 : index
    %c0_13 = arith.constant 0 : index
    %14 = vector.load %arg7[%c0_12, %c0_13] : memref<32x160xf32, #tpu.memory_space<vmem>>, vector<32x160xf32>
    tpu.vector_store %arg7[%c0_12, %c0_13], %13 {strides = array<i32>} : memref<32x160xf32, #tpu.memory_space<vmem>>, vector<32x160xf32>,
    return
  }
  func.func @transform_0(%arg0: i32) -> (i32, i32) {
    %c0_i32 = arith.constant 0 : i32
    %c0_i32_0 = arith.constant 0 : i32
    return %arg0, %c0_i32 : i32, i32
  }
  func.func @transform_1(%arg0: i32) -> (i32, i32) {
    %c0_i32 = arith.constant 0 : i32
    %c0_i32_0 = arith.constant 0 : i32
    %c0_i32_1 = arith.constant 0 : i32
    return %c0_i32, %c0_i32_0 : i32, i32
  }
  func.func @transform_2(%arg0: i32) -> (i32, i32) {
    %c0_i32 = arith.constant 0 : i32
    %c0_i32_0 = arith.constant 0 : i32
    %c0_i32_1 = arith.constant 0 : i32
    return %c0_i32, %c0_i32_0 : i32, i32
  }
  func.func @transform_3(%arg0: i32) -> (i32, i32) {
    %c0_i32 = arith.constant 0 : i32
    %c0_i32_0 = arith.constant 0 : i32
    %c0_i32_1 = arith.constant 0 : i32
    return %c0_i32, %c0_i32_0 : i32, i32
  }
  func.func @transform_4(%arg0: i32) -> (i32, i32) {
    %c0_i32 = arith.constant 0 : i32
    %c0_i32_0 = arith.constant 0 : i32
    %c0_i32_1 = arith.constant 0 : i32
    return %c0_i32, %c0_i32_0 : i32, i32
  }
  func.func @transform_5(%arg0: i32) -> (i32, i32) {
    %c0_i32 = arith.constant 0 : i32
    %c0_i32_0 = arith.constant 0 : i32
    return %arg0, %c0_i32 : i32, i32
  }
  func.func @transform_6(%arg0: i32) -> (i32, i32) {
    %c0_i32 = arith.constant 0 : i32
    %c0_i32_0 = arith.constant 0 : i32
    return %arg0, %c0_i32 : i32, i32
  }
}

</mosaic_0001>

<llo_original>
// kernel: tpu_custom_call.1
$region0: #{tpu_custom_call.1}
  #allocation0 [shape = 'u32[]', space=smem, size = 0x4, offset = 0x4, fixed_abs, tag = 'smem constant byte address 0x4 - core index']
  #allocation1 [shape = 'u32[144,128]{1,0:T(1,128)}', space=vmem, size = 0x12000, scoped, tag = 'internal scratch']
  %s0 = inlined_call_operand.vmem [shape: f32[32,676], index: 0, kind: input, shape index: {}]
  %s1 = inlined_call_operand.vmem [shape: f32[676,160], index: 1, kind: input, shape index: {}]
  %s2 = inlined_call_operand.vmem [shape: f32[676,160], index: 2, kind: input, shape index: {}]
  %s3 = inlined_call_operand.vmem [shape: f32[1,160], index: 3, kind: input, shape index: {}]
  %s4 = inlined_call_operand.vmem [shape: f32[1,160], index: 4, kind: input, shape index: {}]
  %s5 = inlined_call_operand.vmem [shape: f32[32,160], index: 5, kind: input, shape index: {}]
  %s6 = inlined_call_operand.hbm [shape: f32[32,160], index: 6, kind: output, shape index: {}]
  %s7 = sld [smem:[#allocation0]]
  $region34: #{tpu_custom_call.1} parent=0
    _
  %s9 = ssub.s32 1, %s7
  %s10 = scalar_select 0, %s9, %s7
  $region1: #{tpu_custom_call.1} parent=0
    #allocation2 [shape = 'u8[32768]{0}', space=vmem, size = 0x8000, scoped, tag = 'output window, operand 0, single buffered']
    #allocation3 [shape = 's32[1]{0}', space=sflag, size = 0x4, scoped, tag = 'scoped memory for tpu_custom_call.1']
    %11 = vsyncpa [#allocation3], 0
    // Predicated region
    $region2: #{tpu_custom_call.1} parent=1 // pred_check
      _
    $region3: #{tpu_custom_call.1} parent=1 // pred_check_branch
      %13 = sbr.rel (0) target = $region5
    $region4: #{tpu_custom_call.1} parent=1 // pred_region
      _
    $region5: #{tpu_custom_call.1} parent=1 // pred_fallthru
      _
    // Predicated region
    $region6: #{tpu_custom_call.1} parent=1 // pred_check
      _
    $region7: #{tpu_custom_call.1} parent=1 // pred_check_branch
      %15 = sbr.rel (0) target = $region9
    $region8: #{tpu_custom_call.1} parent=1 // pred_region
      _
    $region9: #{tpu_custom_call.1} parent=1 // pred_fallthru
      _
    // Predicated region
    $region10: #{tpu_custom_call.1} parent=1 // pred_check
      _
    $region11: #{tpu_custom_call.1} parent=1 // pred_check_branch
      %17 = sbr.rel (0) target = $region13
    $region12: #{tpu_custom_call.1} parent=1 // pred_region
      _
    $region13: #{tpu_custom_call.1} parent=1 // pred_fallthru
      _
    // Predicated region
    $region14: #{tpu_custom_call.1} parent=1 // pred_check
      _
    $region15: #{tpu_custom_call.1} parent=1 // pred_check_branch
      %19 = sbr.rel (0) target = $region17
    $region16: #{tpu_custom_call.1} parent=1 // pred_region
      _
    $region17: #{tpu_custom_call.1} parent=1 // pred_fallthru
      _
    // Predicated region
    $region18: #{tpu_custom_call.1} parent=1 // pred_check
      _
    $region19: #{tpu_custom_call.1} parent=1 // pred_check_branch
      %21 = sbr.rel (0) target = $region21
    $region20: #{tpu_custom_call.1} parent=1 // pred_region
      _
    $region21: #{tpu_custom_call.1} parent=1 // pred_fallthru
      _
    // Predicated region
    $region22: #{tpu_custom_call.1} parent=1 // pred_check
      _
    $region23: #{tpu_custom_call.1} parent=1 // pred_check_branch
      %23 = sbr.rel (0) target = $region25
    $region24: #{tpu_custom_call.1} parent=1 // pred_region
      _
    $region25: #{tpu_custom_call.1} parent=1 // pred_fallthru
      _
    %v24 = vld [vmem:[%s0] sm:$0xff]
    %v25 = vld [vmem:[%s0 + $0x8] sm:$0xff]
    %v26 = vld [vmem:[%s0 + $0x10] sm:$0xff]
    %v27 = vld [vmem:[%s0 + $0x18] sm:$0xff]
    %v28 = vld [vmem:[%s0 + $0x20] sm:$0xff]
    %v29 = vld [vmem:[%s0 + $0x28] sm:$0xff]
    %v30 = vld [vmem:[%s0 + $0x30] sm:$0xff]
    %v31 = vld [vmem:[%s0 + $0x38] sm:$0xff]
    %v32 = vld [vmem:[%s0 + $0x40] sm:$0xff]
    %v33 = vld [vmem:[%s0 + $0x48] sm:$0xff]
    %v34 = vld [vmem:[%s0 + $0x50] sm:$0xff]
    %v35 = vld [vmem:[%s0 + $0x58] sm:$0xff]
    %v36 = vld [vmem:[%s0 + $0x60] sm:$0xff]
    %v37 = vld [vmem:[%s0 + $0x68] sm:$0xff]
    %v38 = vld [vmem:[%s0 + $0x70] sm:$0xff]
    %v39 = vld [vmem:[%s0 + $0x78] sm:$0xff]
    %v40 = vld [vmem:[%s0 + $0x80] sm:$0xff]
    %v41 = vld [vmem:[%s0 + $0x88] sm:$0xff]
    %v42 = vld [vmem:[%s0 + $0x90] sm:$0xff]
    %v43 = vld [vmem:[%s0 + $0x98] sm:$0xff]
    %v44 = vld [vmem:[%s0 + $0xa0] sm:$0xff]
    %v45 = vld [vmem:[%s0 + $0xa8] sm:$0xff]
    %v46 = vld [vmem:[%s0 + $0xb0] sm:$0xff]
    %v47 = vld [vmem:[%s0 + $0xb8] sm:$0xff]
    %v48 = vld [vmem:[%s1] sm:$0xff]
    %v49 = vld [vmem:[%s1 + $0x8] sm:$0xff]
    %v50 = vld [vmem:[%s1 + $0x10] sm:$0xff]
    %v51 = vld [vmem:[%s1 + $0x18] sm:$0xff]
    %v52 = vld [vmem:[%s1 + $0x20] sm:$0xff]
    %v53 = vld [vmem:[%s1 + $0x28] sm:$0xff]
    %v54 = vld [vmem:[%s1 + $0x30] sm:$0xff]
    %v55 = vld [vmem:[%s1 + $0x38] sm:$0xff]
    %v56 = vld [vmem:[%s1 + $0x40] sm:$0xff]
    %v57 = vld [vmem:[%s1 + $0x48] sm:$0xff]
    %v58 = vld [vmem:[%s1 + $0x50] sm:$0xff]
    %v59 = vld [vmem:[%s1 + $0x58] sm:$0xff]
    %v60 = vld [vmem:[%s1 + $0x60] sm:$0xff]
    %v61 = vld [vmem:[%s1 + $0x68] sm:$0xff]
    %v62 = vld [vmem:[%s1 + $0x70] sm:$0xff]
    %v63 = vld [vmem:[%s1 + $0x78] sm:$0xff]
    %v64 = vld [vmem:[%s1 + $0x80] sm:$0xff]
    %v65 = vld [vmem:[%s1 + $0x88] sm:$0xff]
    %v66 = vld [vmem:[%s1 + $0x90] sm:$0xff]
    %v67 = vld [vmem:[%s1 + $0x98] sm:$0xff]
    %v68 = vld [vmem:[%s1 + $0xa0] sm:$0xff]
    %v69 = vld [vmem:[%s1 + $0xa8] sm:$0xff]
    %v70 = vld [vmem:[%s1 + $0xb0] sm:$0xff]
    %v71 = vld [vmem:[%s1 + $0xb8] sm:$0xff]
    %v72 = vld [vmem:[%s1 + $0xc0] sm:$0xff]
    %v73 = vld [vmem:[%s1 + $0xc8] sm:$0xff]
    %v74 = vld [vmem:[%s1 + $0xd0] sm:$0xff]
    %v75 = vld [vmem:[%s1 + $0xd8] sm:$0xff]
    %v76 = vld [vmem:[%s1 + $0xe0] sm:$0xff]
    %v77 = vld [vmem:[%s1 + $0xe8] sm:$0xff]
    %v78 = vld [vmem:[%s1 + $0xf0] sm:$0xff]
    %v79 = vld [vmem:[%s1 + $0xf8] sm:$0xff]
    %v80 = vld [vmem:[%s1 + $0x100] sm:$0xff]
    %v81 = vld [vmem:[%s1 + $0x108] sm:$0xff]
    %v82 = vld [vmem:[%s1 + $0x110] sm:$0xff]
    %v83 = vld [vmem:[%s1 + $0x118] sm:$0xff]
    %v84 = vld [vmem:[%s1 + $0x120] sm:$0xff]
    %v85 = vld [vmem:[%s1 + $0x128] sm:$0xff]
    %v86 = vld [vmem:[%s1 + $0x130] sm:$0xff]
    %v87 = vld [vmem:[%s1 + $0x138] sm:$0xff]
    %v88 = vld [vmem:[%s1 + $0x140] sm:$0xff]
    %v89 = vld [vmem:[%s1 + $0x148] sm:$0xff]
    %v90 = vld [vmem:[%s1 + $0x150] sm:$0xff]
    %v91 = vld [vmem:[%s1 + $0x158] sm:$0xff]
    %v92 = vld [vmem:[%s1 + $0x160] sm:$0xff]
    %v93 = vld [vmem:[%s1 + $0x168] sm:$0xff]
    %v94 = vld [vmem:[%s1 + $0x170] sm:$0xff]
    %v95 = vld [vmem:[%s1 + $0x178] sm:$0xff]
    %v96 = vld [vmem:[%s1 + $0x180] sm:$0xff]
    %v97 = vld [vmem:[%s1 + $0x188] sm:$0xff]
    %v98 = vld [vmem:[%s1 + $0x190] sm:$0xff]
    %v99 = vld [vmem:[%s1 + $0x198] sm:$0xff]
    %v100 = vld [vmem:[%s1 + $0x1a0] sm:$0xff]
    %v101 = vld [vmem:[%s1 + $0x1a8] sm:$0xff]
    %v102 = vld [vmem:[%s1 + $0x1b0] sm:$0xff]
    %v103 = vld [vmem:[%s1 + $0x1b8] sm:$0xff]
    %v104 = vld [vmem:[%s1 + $0x1c0] sm:$0xff]
    %v105 = vld [vmem:[%s1 + $0x1c8] sm:$0xff]
    %v106 = vld [vmem:[%s1 + $0x1d0] sm:$0xff]
    %v107 = vld [vmem:[%s1 + $0x1d8] sm:$0xff]
    %v108 = vld [vmem:[%s1 + $0x1e0] sm:$0xff]
    %v109 = vld [vmem:[%s1 + $0x1e8] sm:$0xff]
    %v110 = vld [vmem:[%s1 + $0x1f0] sm:$0xff]
    %v111 = vld [vmem:[%s1 + $0x1f8] sm:$0xff]
    %v112 = vld [vmem:[%s1 + $0x200] sm:$0xff]
    %v113 = vld [vmem:[%s1 + $0x208] sm:$0xff]
    %v114 = vld [vmem:[%s1 + $0x210] sm:$0xff]
    %v115 = vld [vmem:[%s1 + $0x218] sm:$0xff]
    %v116 = vld [vmem:[%s1 + $0x220] sm:$0xff]
    %v117 = vld [vmem:[%s1 + $0x228] sm:$0xff]
    %v118 = vld [vmem:[%s1 + $0x230] sm:$0xff]
    %v119 = vld [vmem:[%s1 + $0x238] sm:$0xff]
    %v120 = vld [vmem:[%s1 + $0x240] sm:$0xff]
    %v121 = vld [vmem:[%s1 + $0x248] sm:$0xff]
    %v122 = vld [vmem:[%s1 + $0x250] sm:$0xff]
    %v123 = vld [vmem:[%s1 + $0x258] sm:$0xff]
    %v124 = vld [vmem:[%s1 + $0x260] sm:$0xff]
    %v125 = vld [vmem:[%s1 + $0x268] sm:$0xff]
    %v126 = vld [vmem:[%s1 + $0x270] sm:$0xff]
    %v127 = vld [vmem:[%s1 + $0x278] sm:$0xff]
    %v128 = vld [vmem:[%s1 + $0x280] sm:$0xff]
    %v129 = vld [vmem:[%s1 + $0x288] sm:$0xff]
    %v130 = vld [vmem:[%s1 + $0x290] sm:$0xff]
    %v131 = vld [vmem:[%s1 + $0x298] sm:$0xff]
    %v132 = vld [vmem:[%s1 + $0x2a0] sm:$0xff]
    %v133 = vld [vmem:[%s1 + $0x2a8] sm:$0xff]
    %v134 = vld [vmem:[%s1 + $0x2b0] sm:$0xff]
    %v135 = vld [vmem:[%s1 + $0x2b8] sm:$0xff]
    %v136 = vld [vmem:[%s1 + $0x2c0] sm:$0xff]
    %v137 = vld [vmem:[%s1 + $0x2c8] sm:$0xff]
    %v138 = vld [vmem:[%s1 + $0x2d0] sm:$0xff]
    %v139 = vld [vmem:[%s1 + $0x2d8] sm:$0xff]
    %v140 = vld [vmem:[%s1 + $0x2e0] sm:$0xff]
    %v141 = vld [vmem:[%s1 + $0x2e8] sm:$0xff]
    %v142 = vld [vmem:[%s1 + $0x2f0] sm:$0xff]
    %v143 = vld [vmem:[%s1 + $0x2f8] sm:$0xff]
    %v144 = vld [vmem:[%s1 + $0x300] sm:$0xff]
    %v145 = vld [vmem:[%s1 + $0x308] sm:$0xff]
    %v146 = vld [vmem:[%s1 + $0x310] sm:$0xff]
    %v147 = vld [vmem:[%s1 + $0x318] sm:$0xff]
    %v148 = vld [vmem:[%s1 + $0x320] sm:$0xff]
    %v149 = vld [vmem:[%s1 + $0x328] sm:$0xff]
    %v150 = vld [vmem:[%s1 + $0x330] sm:$0xff]
    %v151 = vld [vmem:[%s1 + $0x338] sm:$0xff]
    %v152 = vld [vmem:[%s1 + $0x340] sm:$0xff]
    %v153 = vld [vmem:[%s1 + $0x348] sm:$0xff]
    %v154 = vld [vmem:[%s1 + $0x350] sm:$0xff]
    %v155 = vld [vmem:[%s1 + $0x358] sm:$0xff]
    %v156 = vld [vmem:[%s1 + $0x360] sm:$0xff]
    %v157 = vld [vmem:[%s1 + $0x368] sm:$0xff]
    %v158 = vld [vmem:[%s1 + $0x370] sm:$0xff]
    %v159 = vld [vmem:[%s1 + $0x378] sm:$0xff]
    %v160 = vld [vmem:[%s1 + $0x380] sm:$0xff]
    %v161 = vld [vmem:[%s1 + $0x388] sm:$0xff]
    %v162 = vld [vmem:[%s1 + $0x390] sm:$0xff]
    %v163 = vld [vmem:[%s1 + $0x398] sm:$0xff]
    %v164 = vld [vmem:[%s1 + $0x3a0] sm:$0xff]
    %v165 = vld [vmem:[%s1 + $0x3a8] sm:$0xff]
    %v166 = vld [vmem:[%s1 + $0x3b0] sm:$0xff]
    %v167 = vld [vmem:[%s1 + $0x3b8] sm:$0xff]
    %v168 = vld [vmem:[%s1 + $0x3c0] sm:$0xff]
    %v169 = vld [vmem:[%s1 + $0x3c8] sm:$0xff]
    %v170 = vld [vmem:[%s1 + $0x3d0] sm:$0xff]
    %v171 = vld [vmem:[%s1 + $0x3d8] sm:$0xff]
    %v172 = vld [vmem:[%s1 + $0x3e0] sm:$0xff]
    %v173 = vld [vmem:[%s1 + $0x3e8] sm:$0xff]
    %v174 = vld [vmem:[%s1 + $0x3f0] sm:$0xff]
    %v175 = vld [vmem:[%s1 + $0x3f8] sm:$0xff]
    %v176 = vld [vmem:[%s1 + $0x400] sm:$0xff]
    %v177 = vld [vmem:[%s1 + $0x408] sm:$0xff]
    %v178 = vld [vmem:[%s1 + $0x410] sm:$0xff]
    %v179 = vld [vmem:[%s1 + $0x418] sm:$0xff]
    %v180 = vld [vmem:[%s1 + $0x420] sm:$0xff]
    %v181 = vld [vmem:[%s1 + $0x428] sm:$0xff]
    %v182 = vld [vmem:[%s1 + $0x430] sm:$0xff]
    %v183 = vld [vmem:[%s1 + $0x438] sm:$0xff]
    %v184 = vld [vmem:[%s1 + $0x440] sm:$0xff]
    %v185 = vld [vmem:[%s1 + $0x448] sm:$0xff]
    %v186 = vld [vmem:[%s1 + $0x450] sm:$0xff]
    %v187 = vld [vmem:[%s1 + $0x458] sm:$0xff]
    %v188 = vld [vmem:[%s1 + $0x460] sm:$0xff]
    %v189 = vld [vmem:[%s1 + $0x468] sm:$0xff]
    %v190 = vld [vmem:[%s1 + $0x470] sm:$0xff]
    %v191 = vld [vmem:[%s1 + $0x478] sm:$0xff]
    %v192 = vld [vmem:[%s1 + $0x480] sm:$0xff]
    %v193 = vld [vmem:[%s1 + $0x488] sm:$0xff]
    %v194 = vld [vmem:[%s1 + $0x490] sm:$0xff]
    %v195 = vld [vmem:[%s1 + $0x498] sm:$0xff]
    %v196 = vld [vmem:[%s1 + $0x4a0] sm:$0xff]
    %v197 = vld [vmem:[%s1 + $0x4a8] sm:$0xff]
    %v198 = vld [vmem:[%s1 + $0x4b0] sm:$0xff]
    %v199 = vld [vmem:[%s1 + $0x4b8] sm:$0xff]
    %v200 = vld [vmem:[%s1 + $0x4c0] sm:$0xff]
    %v201 = vld [vmem:[%s1 + $0x4c8] sm:$0xff]
    %v202 = vld [vmem:[%s1 + $0x4d0] sm:$0xff]
    %v203 = vld [vmem:[%s1 + $0x4d8] sm:$0xff]
    %v204 = vld [vmem:[%s1 + $0x4e0] sm:$0xff]
    %v205 = vld [vmem:[%s1 + $0x4e8] sm:$0xff]
    %v206 = vld [vmem:[%s1 + $0x4f0] sm:$0xff]
    %v207 = vld [vmem:[%s1 + $0x4f8] sm:$0xff]
    %v208 = vld [vmem:[%s1 + $0x500] sm:$0xff]
    %v209 = vld [vmem:[%s1 + $0x508] sm:$0xff]
    %v210 = vld [vmem:[%s1 + $0x510] sm:$0xff]
    %v211 = vld [vmem:[%s1 + $0x518] sm:$0xff]
    %v212 = vld [vmem:[%s1 + $0x520] sm:$0xff]
    %v213 = vld [vmem:[%s1 + $0x528] sm:$0xff]
    %v214 = vld [vmem:[%s1 + $0x530] sm:$0xff]
    %v215 = vld [vmem:[%s1 + $0x538] sm:$0xff]
    %v216 = vld [vmem:[%s1 + $0x540] sm:$0xf]
    %v217 = vld [vmem:[%s1 + $0x548] sm:$0xf]
    %v218 = vld [vmem:[%s3] sm:$0x3]
    %v220 = vlaneseq
    %v221 = vshrl.u32 %v220, 7
    %v222 = vsub.s32 0, %v221
    %v223 = vrot.slane %v218, %v222
    %v224 = vlaneseq
    %v225 = vshrl.u32 %v224, 7
    %v226 = vsub.s32 1, %v225
    %v227 = vrot.slane %v218, %v226
    %vm230 = vcmask 293888
    %v232 = vsel %vm230, %v29, 0
    %v235 = vsel %vm230, %v35, 0
    %v238 = vsel %vm230, %v41, 0
    %v241 = vsel %vm230, %v47, 0
    %vm243 = vcmask 1043456
    %v245 = vsel %vm243, %v216, 0
    %v248 = vsel %vm243, %v217, 0
    %250 = vmatprep.subr.mxu0 %v49
    %251 = vmatpush1.msra.mxu0 %v48
    %252 = vmatprep.subr.mxu0 %v51
    %253 = vmatpush1.msra.mxu0 %v50
    %254 = vmatprep.subr.mxu0 %v53
    %255 = vmatpush1.msra.mxu0 %v52
    %256 = vmatprep.subr.mxu0 %v55
    %257 = vmatpush1.msra.mxu0 %v54
    %258 = vmatprep.subr.mxu0 %v57
    %259 = vmatpush1.msra.mxu0 %v56
    %260 = vmatprep.subr.mxu0 %v59
    %261 = vmatpush1.msra.mxu0 %v58
    %262 = vmatprep.subr.mxu0 %v61
    %263 = vmatpush1.msra.mxu0 %v60
    %264 = vmatprep.subr.mxu0 %v63
    %265 = vmatpush1.msra.mxu0 %v62
    %266 = vmatprep.subr.mxu0 %v65
    %267 = vmatpush1.msra.mxu0 %v64
    %268 = vmatprep.subr.mxu0 %v67
    %269 = vmatpush1.msra.mxu0 %v66
    %270 = vmatprep.subr.mxu0 %v69
    %271 = vmatpush1.msra.mxu0 %v68
    %272 = vmatprep.subr.mxu0 %v71
    %273 = vmatpush1.msra.mxu0 %v70
    %274 = vmatprep.subr.mxu0 %v73
    %275 = vmatpush1.msra.mxu0 %v72
    %276 = vmatprep.subr.mxu0 %v75
    %277 = vmatpush1.msra.mxu0 %v74
    %278 = vmatprep.subr.mxu0 %v77
    %279 = vmatpush1.msra.mxu0 %v76
    %280 = vmatprep.subr.mxu0 %v79
    %281 = vmatpush1.msra.mxu0 %v78
    %282 = vmatprep.subr.mxu0 %v81
    %283 = vmatpush1.msra.mxu0 %v80
    %284 = vmatprep.subr.mxu0 %v83
    %285 = vmatpush1.msra.mxu0 %v82
    %286 = vmatprep.subr.mxu0 %v85
    %287 = vmatpush1.msra.mxu0 %v84
    %288 = vmatprep.subr.mxu0 %v87
    %289 = vmatpush1.msra.mxu0 %v86
    %290 = vmatprep.subr.mxu0 %v89
    %291 = vmatpush1.msra.mxu0 %v88
    %292 = vmatprep.subr.mxu0 %v91
    %293 = vmatpush1.msra.mxu0 %v90
    %294 = vmatprep.subr.mxu0 %v93
    %295 = vmatpush1.msra.mxu0 %v92
    %296 = vmatprep.subr.mxu0 %v95
    %297 = vmatpush1.msra.mxu0 %v94
    %298 = vmatprep.subr.mxu0 %v97
    %299 = vmatpush1.msra.mxu0 %v96
    %300 = vmatprep.subr.mxu0 %v99
    %301 = vmatpush1.msra.mxu0 %v98
    %302 = vmatprep.subr.mxu0 %v101
    %303 = vmatpush1.msra.mxu0 %v100
    %304 = vmatprep.subr.mxu0 %v103
    %305 = vmatpush1.msra.mxu0 %v102
    %306 = vmatprep.subr.mxu0 %v105
    %307 = vmatpush1.msra.mxu0 %v104
    %308 = vmatprep.subr.mxu0 %v107
    %309 = vmatpush1.msra.mxu0 %v106
    %310 = vmatprep.subr.mxu0 %v109
    %311 = vmatpush1.msra.mxu0 %v108
    %312 = vmatprep.subr.mxu0 %v111
    %313 = vmatpush1.msra.mxu0 %v110
    %314 = vmatprep.mubr.f32.mxu0 %v25
    %315 = vmatmul.mubr.f32.gmra.mrb[0].mxu0 %v24
    %v316 = vpop.f32.mrb[0].mxu0
    %v317 = vadd.f32 %v223, %v316
    %v318 = vpop.f32.mrb[0].mxu0
    %v319 = vadd.f32 %v227, %v318
    %320 = vmatprep.mubr.f32.mxu0 %v31
    %321 = vmatmul.mubr.f32.gmra.mrb[0].mxu0 %v30
    %v322 = vpop.f32.mrb[0].mxu0
    %v323 = vadd.f32 %v223, %v322
    %v324 = vpop.f32.mrb[0].mxu0
    %v325 = vadd.f32 %v227, %v324
    %326 = vmatprep.mubr.f32.mxu0 %v37
    %327 = vmatmul.mubr.f32.gmra.mrb[0].mxu0 %v36
    %v328 = vpop.f32.mrb[0].mxu0
    %v329 = vadd.f32 %v223, %v328
    %v330 = vpop.f32.mrb[0].mxu0
    %v331 = vadd.f32 %v227, %v330
    %332 = vmatprep.mubr.f32.mxu0 %v43
    %333 = vmatmul.mubr.f32.gmra.mrb[0].mxu0 %v42
    %v334 = vpop.f32.mrb[0].mxu0
    %v335 = vadd.f32 %v223, %v334
    %v336 = vpop.f32.mrb[0].mxu0
    %v337 = vadd.f32 %v227, %v336
    %338 = vdwg.mxu0
    %339 = vmatprep.subr.mxu0 %v113
    %340 = vmatpush1.msra.mxu0 %v112
    %341 = vmatprep.subr.mxu0 %v115
    %342 = vmatpush1.msra.mxu0 %v114
    %343 = vmatprep.subr.mxu0 %v117
    %344 = vmatpush1.msra.mxu0 %v116
    %345 = vmatprep.subr.mxu0 %v119
    %346 = vmatpush1.msra.mxu0 %v118
    %347 = vmatprep.subr.mxu0 %v121
    %348 = vmatpush1.msra.mxu0 %v120
    %349 = vmatprep.subr.mxu0 %v123
    %350 = vmatpush1.msra.mxu0 %v122
    %351 = vmatprep.subr.mxu0 %v125
    %352 = vmatpush1.msra.mxu0 %v124
    %353 = vmatprep.subr.mxu0 %v127
    %354 = vmatpush1.msra.mxu0 %v126
    %355 = vmatprep.subr.mxu0 %v129
    %356 = vmatpush1.msra.mxu0 %v128
    %357 = vmatprep.subr.mxu0 %v131
    %358 = vmatpush1.msra.mxu0 %v130
    %359 = vmatprep.subr.mxu0 %v133
    %360 = vmatpush1.msra.mxu0 %v132
    %361 = vmatprep.subr.mxu0 %v135
    %362 = vmatpush1.msra.mxu0 %v134
    %363 = vmatprep.subr.mxu0 %v137
    %364 = vmatpush1.msra.mxu0 %v136
    %365 = vmatprep.subr.mxu0 %v139
    %366 = vmatpush1.msra.mxu0 %v138
    %367 = vmatprep.subr.mxu0 %v141
    %368 = vmatpush1.msra.mxu0 %v140
    %369 = vmatprep.subr.mxu0 %v143
    %370 = vmatpush1.msra.mxu0 %v142
    %371 = vmatprep.subr.mxu0 %v145
    %372 = vmatpush1.msra.mxu0 %v144
    %373 = vmatprep.subr.mxu0 %v147
    %374 = vmatpush1.msra.mxu0 %v146
    %375 = vmatprep.subr.mxu0 %v149
    %376 = vmatpush1.msra.mxu0 %v148
    %377 = vmatprep.subr.mxu0 %v151
    %378 = vmatpush1.msra.mxu0 %v150
    %379 = vmatprep.subr.mxu0 %v153
    %380 = vmatpush1.msra.mxu0 %v152
    %381 = vmatprep.subr.mxu0 %v155
    %382 = vmatpush1.msra.mxu0 %v154
    %383 = vmatprep.subr.mxu0 %v157
    %384 = vmatpush1.msra.mxu0 %v156
    %385 = vmatprep.subr.mxu0 %v159
    %386 = vmatpush1.msra.mxu0 %v158
    %387 = vmatprep.subr.mxu0 %v161
    %388 = vmatpush1.msra.mxu0 %v160
    %389 = vmatprep.subr.mxu0 %v163
    %390 = vmatpush1.msra.mxu0 %v162
    %391 = vmatprep.subr.mxu0 %v165
    %392 = vmatpush1.msra.mxu0 %v164
    %393 = vmatprep.subr.mxu0 %v167
    %394 = vmatpush1.msra.mxu0 %v166
    %395 = vmatprep.subr.mxu0 %v169
    %396 = vmatpush1.msra.mxu0 %v168
    %397 = vmatprep.subr.mxu0 %v171
    %398 = vmatpush1.msra.mxu0 %v170
    %399 = vmatprep.subr.mxu0 %v173
    %400 = vmatpush1.msra.mxu0 %v172
    %401 = vmatprep.subr.mxu0 %v175
    %402 = vmatpush1.msra.mxu0 %v174
    %403 = vmatprep.mubr.f32.mxu0 %v27
    %404 = vmatmul.mubr.f32.gmra.mrb[0].mxu0 %v26
    %v405 = vpop.f32.mrb[0].mxu0
    %v406 = vadd.f32 %v317, %v405
    %v407 = vpop.f32.mrb[0].mxu0
    %v408 = vadd.f32 %v319, %v407
    %409 = vmatprep.mubr.f32.mxu0 %v33
    %410 = vmatmul.mubr.f32.gmra.mrb[0].mxu0 %v32
    %v411 = vpop.f32.mrb[0].mxu0
    %v412 = vadd.f32 %v323, %v411
    %v413 = vpop.f32.mrb[0].mxu0
    %v414 = vadd.f32 %v325, %v413
    %415 = vmatprep.mubr.f32.mxu0 %v39
    %416 = vmatmul.mubr.f32.gmra.mrb[0].mxu0 %v38
    %v417 = vpop.f32.mrb[0].mxu0
    %v418 = vadd.f32 %v329, %v417
    %v419 = vpop.f32.mrb[0].mxu0
    %v420 = vadd.f32 %v331, %v419
    %421 = vmatprep.mubr.f32.mxu0 %v45
    %422 = vmatmul.mubr.f32.gmra.mrb[0].mxu0 %v44
    %v423 = vpop.f32.mrb[0].mxu0
    %v424 = vadd.f32 %v335, %v423
    %v425 = vpop.f32.mrb[0].mxu0
    %v426 = vadd.f32 %v337, %v425
    %427 = vdwg.mxu0
    %428 = vmatprep.subr.mxu0 %v177
    %429 = vmatpush1.msra.mxu0 %v176
    %430 = vmatprep.subr.mxu0 %v179
    %431 = vmatpush1.msra.mxu0 %v178
    %432 = vmatprep.subr.mxu0 %v181
    %433 = vmatpush1.msra.mxu0 %v180
    %434 = vmatprep.subr.mxu0 %v183
    %435 = vmatpush1.msra.mxu0 %v182
    %436 = vmatprep.subr.mxu0 %v185
    %437 = vmatpush1.msra.mxu0 %v184
    %438 = vmatprep.subr.mxu0 %v187
    %439 = vmatpush1.msra.mxu0 %v186
    %440 = vmatprep.subr.mxu0 %v189
    %441 = vmatpush1.msra.mxu0 %v188
    %442 = vmatprep.subr.mxu0 %v191
    %443 = vmatpush1.msra.mxu0 %v190
    %444 = vmatprep.subr.mxu0 %v193
    %445 = vmatpush1.msra.mxu0 %v192
    %446 = vmatprep.subr.mxu0 %v195
    %447 = vmatpush1.msra.mxu0 %v194
    %448 = vmatprep.subr.mxu0 %v197
    %449 = vmatpush1.msra.mxu0 %v196
    %450 = vmatprep.subr.mxu0 %v199
    %451 = vmatpush1.msra.mxu0 %v198
    %452 = vmatprep.subr.mxu0 %v201
    %453 = vmatpush1.msra.mxu0 %v200
    %454 = vmatprep.subr.mxu0 %v203
    %455 = vmatpush1.msra.mxu0 %v202
    %456 = vmatprep.subr.mxu0 %v205
    %457 = vmatpush1.msra.mxu0 %v204
    %458 = vmatprep.subr.mxu0 %v207
    %459 = vmatpush1.msra.mxu0 %v206
    %460 = vmatprep.subr.mxu0 %v209
    %461 = vmatpush1.msra.mxu0 %v208
    %462 = vmatprep.subr.mxu0 %v211
    %463 = vmatpush1.msra.mxu0 %v210
    %464 = vmatprep.subr.mxu0 %v213
    %465 = vmatpush1.msra.mxu0 %v212
    %466 = vmatprep.subr.mxu0 %v215
    %467 = vmatpush1.msra.mxu0 %v214
    %468 = vmatprep.subr.mxu0 %v248
    %469 = vmatpush1.msra.mxu0 %v245
    %470 = vmatprep.subr.mxu0 0.0
    %471 = vmatpush1.msra.mxu0 0.0
    %472 = vmatprep.subr.mxu0 0.0
    %473 = vmatpush1.msra.mxu0 0.0
    %474 = vmatprep.subr.mxu0 0.0
    %475 = vmatpush1.msra.mxu0 0.0
    %476 = vmatprep.subr.mxu0 0.0
    %477 = vmatpush1.msra.mxu0 0.0
    %478 = vmatprep.subr.mxu0 0.0
    %479 = vmatpush1.msra.mxu0 0.0
    %480 = vmatprep.subr.mxu0 0.0
    %481 = vmatpush1.msra.mxu0 0.0
    %482 = vmatprep.subr.mxu0 0.0
    %483 = vmatpush1.msra.mxu0 0.0
    %484 = vmatprep.subr.mxu0 0.0
    %485 = vmatpush1.msra.mxu0 0.0
    %486 = vmatprep.subr.mxu0 0.0
    %487 = vmatpush1.msra.mxu0 0.0
    %488 = vmatprep.subr.mxu0 0.0
    %489 = vmatpush1.msra.mxu0 0.0
    %490 = vmatprep.subr.mxu0 0.0
    %491 = vmatpush1.msra.mxu0 0.0
    %492 = vmatprep.mubr.f32.mxu0 %v232
    %493 = vmatmul.mubr.f32.gmra.mrb[0].mxu0 %v28
    %v494 = vpop.f32.mrb[0].mxu0
    %v495 = vadd.f32 %v406, %v494
    %v496 = vpop.f32.mrb[0].mxu0
    %v497 = vadd.f32 %v408, %v496
    %498 = vmatprep.mubr.f32.mxu0 %v235
    %499 = vmatmul.mubr.f32.gmra.mrb[0].mxu0 %v34
    %v500 = vpop.f32.mrb[0].mxu0
    %v501 = vadd.f32 %v412, %v500
    %v502 = vpop.f32.mrb[0].mxu0
    %v503 = vadd.f32 %v414, %v502
    %504 = vmatprep.mubr.f32.mxu0 %v238
    %505 = vmatmul.mubr.f32.gmra.mrb[0].mxu0 %v40
    %v506 = vpop.f32.mrb[0].mxu0
    %v507 = vadd.f32 %v418, %v506
    %v508 = vpop.f32.mrb[0].mxu0
    %v509 = vadd.f32 %v420, %v508
    %510 = vmatprep.mubr.f32.mxu0 %v241
    %511 = vmatmul.mubr.f32.gmra.mrb[0].mxu0 %v46
    %v512 = vpop.f32.mrb[0].mxu0
    %v513 = vadd.f32 %v424, %v512
    %v514 = vpop.f32.mrb[0].mxu0
    %v515 = vadd.f32 %v426, %v514
    %516 = vdwg.mxu0
    %v517 = vld [vmem:[%s2] sm:$0xff]
    %v518 = vld [vmem:[%s2 + $0x8] sm:$0xff]
    %v519 = vld [vmem:[%s2 + $0x10] sm:$0xff]
    %v520 = vld [vmem:[%s2 + $0x18] sm:$0xff]
    %v521 = vld [vmem:[%s2 + $0x20] sm:$0xff]
    %v522 = vld [vmem:[%s2 + $0x28] sm:$0xff]
    %v523 = vld [vmem:[%s2 + $0x30] sm:$0xff]
    %v524 = vld [vmem:[%s2 + $0x38] sm:$0xff]
    %v525 = vld [vmem:[%s2 + $0x40] sm:$0xff]
    %v526 = vld [vmem:[%s2 + $0x48] sm:$0xff]
    %v527 = vld [vmem:[%s2 + $0x50] sm:$0xff]
    %v528 = vld [vmem:[%s2 + $0x58] sm:$0xff]
    %v529 = vld [vmem:[%s2 + $0x60] sm:$0xff]
    %v530 = vld [vmem:[%s2 + $0x68] sm:$0xff]
    %v531 = vld [vmem:[%s2 + $0x70] sm:$0xff]
    %v532 = vld [vmem:[%s2 + $0x78] sm:$0xff]
    %v533 = vld [vmem:[%s2 + $0x80] sm:$0xff]
    %v534 = vld [vmem:[%s2 + $0x88] sm:$0xff]
    %v535 = vld [vmem:[%s2 + $0x90] sm:$0xff]
    %v536 = vld [vmem:[%s2 + $0x98] sm:$0xff]
    %v537 = vld [vmem:[%s2 + $0xa0] sm:$0xff]
    %v538 = vld [vmem:[%s2 + $0xa8] sm:$0xff]
    %v539 = vld [vmem:[%s2 + $0xb0] sm:$0xff]
    %v540 = vld [vmem:[%s2 + $0xb8] sm:$0xff]
    %v541 = vld [vmem:[%s2 + $0xc0] sm:$0xff]
    %v542 = vld [vmem:[%s2 + $0xc8] sm:$0xff]
    %v543 = vld [vmem:[%s2 + $0xd0] sm:$0xff]
    %v544 = vld [vmem:[%s2 + $0xd8] sm:$0xff]
    %v545 = vld [vmem:[%s2 + $0xe0] sm:$0xff]
    %v546 = vld [vmem:[%s2 + $0xe8] sm:$0xff]
    %v547 = vld [vmem:[%s2 + $0xf0] sm:$0xff]
    %v548 = vld [vmem:[%s2 + $0xf8] sm:$0xff]
    %v549 = vld [vmem:[%s2 + $0x100] sm:$0xff]
    %v550 = vld [vmem:[%s2 + $0x108] sm:$0xff]
    %v551 = vld [vmem:[%s2 + $0x110] sm:$0xff]
    %v552 = vld [vmem:[%s2 + $0x118] sm:$0xff]
    %v553 = vld [vmem:[%s2 + $0x120] sm:$0xff]
    %v554 = vld [vmem:[%s2 + $0x128] sm:$0xff]
    %v555 = vld [vmem:[%s2 + $0x130] sm:$0xff]
    %v556 = vld [vmem:[%s2 + $0x138] sm:$0xff]
    %v557 = vld [vmem:[%s2 + $0x140] sm:$0xff]
    %v558 = vld [vmem:[%s2 + $0x148] sm:$0xff]
    %v559 = vld [vmem:[%s2 + $0x150] sm:$0xff]
    %v560 = vld [vmem:[%s2 + $0x158] sm:$0xff]
    %v561 = vld [vmem:[%s2 + $0x160] sm:$0xff]
    %v562 = vld [vmem:[%s2 + $0x168] sm:$0xff]
    %v563 = vld [vmem:[%s2 + $0x170] sm:$0xff]
    %v564 = vld [vmem:[%s2 + $0x178] sm:$0xff]
    %v565 = vld [vmem:[%s2 + $0x180] sm:$0xff]
    %v566 = vld [vmem:[%s2 + $0x188] sm:$0xff]
    %v567 = vld [vmem:[%s2 + $0x190] sm:$0xff]
    %v568 = vld [vmem:[%s2 + $0x198] sm:$0xff]
    %v569 = vld [vmem:[%s2 + $0x1a0] sm:$0xff]
    %v570 = vld [vmem:[%s2 + $0x1a8] sm:$0xff]
    %v571 = vld [vmem:[%s2 + $0x1b0] sm:$0xff]
    %v572 = vld [vmem:[%s2 + $0x1b8] sm:$0xff]
    %v573 = vld [vmem:[%s2 + $0x1c0] sm:$0xff]
    %v574 = vld [vmem:[%s2 + $0x1c8] sm:$0xff]
    %v575 = vld [vmem:[%s2 + $0x1d0] sm:$0xff]
    %v576 = vld [vmem:[%s2 + $0x1d8] sm:$0xff]
    %v577 = vld [vmem:[%s2 + $0x1e0] sm:$0xff]
    %v578 = vld [vmem:[%s2 + $0x1e8] sm:$0xff]
    %v579 = vld [vmem:[%s2 + $0x1f0] sm:$0xff]
    %v580 = vld [vmem:[%s2 + $0x1f8] sm:$0xff]
    %v581 = vld [vmem:[%s2 + $0x200] sm:$0xff]
    %v582 = vld [vmem:[%s2 + $0x208] sm:$0xff]
    %v583 = vld [vmem:[%s2 + $0x210] sm:$0xff]
    %v584 = vld [vmem:[%s2 + $0x218] sm:$0xff]
    %v585 = vld [vmem:[%s2 + $0x220] sm:$0xff]
    %v586 = vld [vmem:[%s2 + $0x228] sm:$0xff]
    %v587 = vld [vmem:[%s2 + $0x230] sm:$0xff]
    %v588 = vld [vmem:[%s2 + $0x238] sm:$0xff]
    %v589 = vld [vmem:[%s2 + $0x240] sm:$0xff]
    %v590 = vld [vmem:[%s2 + $0x248] sm:$0xff]
    %v591 = vld [vmem:[%s2 + $0x250] sm:$0xff]
    %v592 = vld [vmem:[%s2 + $0x258] sm:$0xff]
    %v593 = vld [vmem:[%s2 + $0x260] sm:$0xff]
    %v594 = vld [vmem:[%s2 + $0x268] sm:$0xff]
    %v595 = vld [vmem:[%s2 + $0x270] sm:$0xff]
    %v596 = vld [vmem:[%s2 + $0x278] sm:$0xff]
    %v597 = vld [vmem:[%s2 + $0x280] sm:$0xff]
    %v598 = vld [vmem:[%s2 + $0x288] sm:$0xff]
    %v599 = vld [vmem:[%s2 + $0x290] sm:$0xff]
    %v600 = vld [vmem:[%s2 + $0x298] sm:$0xff]
    %v601 = vld [vmem:[%s2 + $0x2a0] sm:$0xff]
    %v602 = vld [vmem:[%s2 + $0x2a8] sm:$0xff]
    %v603 = vld [vmem:[%s2 + $0x2b0] sm:$0xff]
    %v604 = vld [vmem:[%s2 + $0x2b8] sm:$0xff]
    %v605 = vld [vmem:[%s2 + $0x2c0] sm:$0xff]
    %v606 = vld [vmem:[%s2 + $0x2c8] sm:$0xff]
    %v607 = vld [vmem:[%s2 + $0x2d0] sm:$0xff]
    %v608 = vld [vmem:[%s2 + $0x2d8] sm:$0xff]
    %v609 = vld [vmem:[%s2 + $0x2e0] sm:$0xff]
    %v610 = vld [vmem:[%s2 + $0x2e8] sm:$0xff]
    %v611 = vld [vmem:[%s2 + $0x2f0] sm:$0xff]
    %v612 = vld [vmem:[%s2 + $0x2f8] sm:$0xff]
    %v613 = vld [vmem:[%s2 + $0x300] sm:$0xff]
    %v614 = vld [vmem:[%s2 + $0x308] sm:$0xff]
    %v615 = vld [vmem:[%s2 + $0x310] sm:$0xff]
    %v616 = vld [vmem:[%s2 + $0x318] sm:$0xff]
    %v617 = vld [vmem:[%s2 + $0x320] sm:$0xff]
    %v618 = vld [vmem:[%s2 + $0x328] sm:$0xff]
    %v619 = vld [vmem:[%s2 + $0x330] sm:$0xff]
    %v620 = vld [vmem:[%s2 + $0x338] sm:$0xff]
    %v621 = vld [vmem:[%s2 + $0x340] sm:$0xff]
    %v622 = vld [vmem:[%s2 + $0x348] sm:$0xff]
    %v623 = vld [vmem:[%s2 + $0x350] sm:$0xff]
    %v624 = vld [vmem:[%s2 + $0x358] sm:$0xff]
    %v625 = vld [vmem:[%s2 + $0x360] sm:$0xff]
    %v626 = vld [vmem:[%s2 + $0x368] sm:$0xff]
    %v627 = vld [vmem:[%s2 + $0x370] sm:$0xff]
    %v628 = vld [vmem:[%s2 + $0x378] sm:$0xff]
    %v629 = vld [vmem:[%s2 + $0x380] sm:$0xff]
    %v630 = vld [vmem:[%s2 + $0x388] sm:$0xff]
    %v631 = vld [vmem:[%s2 + $0x390] sm:$0xff]
    %v632 = vld [vmem:[%s2 + $0x398] sm:$0xff]
    %v633 = vld [vmem:[%s2 + $0x3a0] sm:$0xff]
    %v634 = vld [vmem:[%s2 + $0x3a8] sm:$0xff]
    %v635 = vld [vmem:[%s2 + $0x3b0] sm:$0xff]
    %v636 = vld [vmem:[%s2 + $0x3b8] sm:$0xff]
    %v637 = vld [vmem:[%s2 + $0x3c0] sm:$0xff]
    %v638 = vld [vmem:[%s2 + $0x3c8] sm:$0xff]
    %v639 = vld [vmem:[%s2 + $0x3d0] sm:$0xff]
    %v640 = vld [vmem:[%s2 + $0x3d8] sm:$0xff]
    %v641 = vld [vmem:[%s2 + $0x3e0] sm:$0xff]
    %v642 = vld [vmem:[%s2 + $0x3e8] sm:$0xff]
    %v643 = vld [vmem:[%s2 + $0x3f0] sm:$0xff]
    %v644 = vld [vmem:[%s2 + $0x3f8] sm:$0xff]
    %v645 = vld [vmem:[%s2 + $0x400] sm:$0xff]
    %v646 = vld [vmem:[%s2 + $0x408] sm:$0xff]
    %v647 = vld [vmem:[%s2 + $0x410] sm:$0xff]
    %v648 = vld [vmem:[%s2 + $0x418] sm:$0xff]
    %v649 = vld [vmem:[%s2 + $0x420] sm:$0xff]
    %v650 = vld [vmem:[%s2 + $0x428] sm:$0xff]
    %v651 = vld [vmem:[%s2 + $0x430] sm:$0xff]
    %v652 = vld [vmem:[%s2 + $0x438] sm:$0xff]
    %v653 = vld [vmem:[%s2 + $0x440] sm:$0xff]
    %v654 = vld [vmem:[%s2 + $0x448] sm:$0xff]
    %v655 = vld [vmem:[%s2 + $0x450] sm:$0xff]
    %v656 = vld [vmem:[%s2 + $0x458] sm:$0xff]
    %v657 = vld [vmem:[%s2 + $0x460] sm:$0xff]
    %v658 = vld [vmem:[%s2 + $0x468] sm:$0xff]
    %v659 = vld [vmem:[%s2 + $0x470] sm:$0xff]
    %v660 = vld [vmem:[%s2 + $0x478] sm:$0xff]
    %v661 = vld [vmem:[%s2 + $0x480] sm:$0xff]
    %v662 = vld [vmem:[%s2 + $0x488] sm:$0xff]
    %v663 = vld [vmem:[%s2 + $0x490] sm:$0xff]
    %v664 = vld [vmem:[%s2 + $0x498] sm:$0xff]
    %v665 = vld [vmem:[%s2 + $0x4a0] sm:$0xff]
    %v666 = vld [vmem:[%s2 + $0x4a8] sm:$0xff]
    %v667 = vld [vmem:[%s2 + $0x4b0] sm:$0xff]
    %v668 = vld [vmem:[%s2 + $0x4b8] sm:$0xff]
    %v669 = vld [vmem:[%s2 + $0x4c0] sm:$0xff]
    %v670 = vld [vmem:[%s2 + $0x4c8] sm:$0xff]
    %v671 = vld [vmem:[%s2 + $0x4d0] sm:$0xff]
    %v672 = vld [vmem:[%s2 + $0x4d8] sm:$0xff]
    %v673 = vld [vmem:[%s2 + $0x4e0] sm:$0xff]
    %v674 = vld [vmem:[%s2 + $0x4e8] sm:$0xff]
    %v675 = vld [vmem:[%s2 + $0x4f0] sm:$0xff]
    %v676 = vld [vmem:[%s2 + $0x4f8] sm:$0xff]
    %v677 = vld [vmem:[%s2 + $0x500] sm:$0xff]
    %v678 = vld [vmem:[%s2 + $0x508] sm:$0xff]
    %v679 = vld [vmem:[%s2 + $0x510] sm:$0xff]
    %v680 = vld [vmem:[%s2 + $0x518] sm:$0xff]
    %v681 = vld [vmem:[%s2 + $0x520] sm:$0xff]
    %v682 = vld [vmem:[%s2 + $0x528] sm:$0xff]
    %v683 = vld [vmem:[%s2 + $0x530] sm:$0xff]
    %v684 = vld [vmem:[%s2 + $0x538] sm:$0xff]
    %v685 = vld [vmem:[%s2 + $0x540] sm:$0xf]
    %v686 = vld [vmem:[%s2 + $0x548] sm:$0xf]
    %v687 = vld [vmem:[%s4] sm:$0x3]
    %v689 = vlaneseq
    %v690 = vshrl.u32 %v689, 7
    %v691 = vsub.s32 0, %v690
    %v692 = vrot.slane %v687, %v691
    %v693 = vlaneseq
    %v694 = vshrl.u32 %v693, 7
    %v695 = vsub.s32 1, %v694
    %v696 = vrot.slane %v687, %v695
    %v700 = vsel %vm243, %v685, 0
    %v703 = vsel %vm243, %v686, 0
    %705 = vmatprep.subr.mxu0 %v518
    %706 = vmatpush1.msra.mxu0 %v517
    %707 = vmatprep.subr.mxu0 %v520
    %708 = vmatpush1.msra.mxu0 %v519
    %709 = vmatprep.subr.mxu0 %v522
    %710 = vmatpush1.msra.mxu0 %v521
    %711 = vmatprep.subr.mxu0 %v524
    %712 = vmatpush1.msra.mxu0 %v523
    %713 = vmatprep.subr.mxu0 %v526
    %714 = vmatpush1.msra.mxu0 %v525
    %715 = vmatprep.subr.mxu0 %v528
    %716 = vmatpush1.msra.mxu0 %v527
    %717 = vmatprep.subr.mxu0 %v530
    %718 = vmatpush1.msra.mxu0 %v529
    %719 = vmatprep.subr.mxu0 %v532
    %720 = vmatpush1.msra.mxu0 %v531
    %721 = vmatprep.subr.mxu0 %v534
    %722 = vmatpush1.msra.mxu0 %v533
    %723 = vmatprep.subr.mxu0 %v536
    %724 = vmatpush1.msra.mxu0 %v535
    %725 = vmatprep.subr.mxu0 %v538
    %726 = vmatpush1.msra.mxu0 %v537
    %727 = vmatprep.subr.mxu0 %v540
    %728 = vmatpush1.msra.mxu0 %v539
    %729 = vmatprep.subr.mxu0 %v542
    %730 = vmatpush1.msra.mxu0 %v541
    %731 = vmatprep.subr.mxu0 %v544
    %732 = vmatpush1.msra.mxu0 %v543
    %733 = vmatprep.subr.mxu0 %v546
    %734 = vmatpush1.msra.mxu0 %v545
    %735 = vmatprep.subr.mxu0 %v548
    %736 = vmatpush1.msra.mxu0 %v547
    %737 = vmatprep.subr.mxu0 %v550
    %738 = vmatpush1.msra.mxu0 %v549
    %739 = vmatprep.subr.mxu0 %v552
    %740 = vmatpush1.msra.mxu0 %v551
    %741 = vmatprep.subr.mxu0 %v554
    %742 = vmatpush1.msra.mxu0 %v553
    %743 = vmatprep.subr.mxu0 %v556
    %744 = vmatpush1.msra.mxu0 %v555
    %745 = vmatprep.subr.mxu0 %v558
    %746 = vmatpush1.msra.mxu0 %v557
    %747 = vmatprep.subr.mxu0 %v560
    %748 = vmatpush1.msra.mxu0 %v559
    %749 = vmatprep.subr.mxu0 %v562
    %750 = vmatpush1.msra.mxu0 %v561
    %751 = vmatprep.subr.mxu0 %v564
    %752 = vmatpush1.msra.mxu0 %v563
    %753 = vmatprep.subr.mxu0 %v566
    %754 = vmatpush1.msra.mxu0 %v565
    %755 = vmatprep.subr.mxu0 %v568
    %756 = vmatpush1.msra.mxu0 %v567
    %757 = vmatprep.subr.mxu0 %v570
    %758 = vmatpush1.msra.mxu0 %v569
    %759 = vmatprep.subr.mxu0 %v572
    %760 = vmatpush1.msra.mxu0 %v571
    %761 = vmatprep.subr.mxu0 %v574
    %762 = vmatpush1.msra.mxu0 %v573
    %763 = vmatprep.subr.mxu0 %v576
    %764 = vmatpush1.msra.mxu0 %v575
    %765 = vmatprep.subr.mxu0 %v578
    %766 = vmatpush1.msra.mxu0 %v577
    %767 = vmatprep.subr.mxu0 %v580
    %768 = vmatpush1.msra.mxu0 %v579
    %769 = vmatprep.mubr.f32.mxu0 %v25
    %770 = vmatmul.mubr.f32.gmra.mrb[0].mxu0 %v24
    %v771 = vpop.f32.mrb[0].mxu0
    %v772 = vadd.f32 %v692, %v771
    %v773 = vpop.f32.mrb[0].mxu0
    %v774 = vadd.f32 %v696, %v773
    %775 = vmatprep.mubr.f32.mxu0 %v31
    %776 = vmatmul.mubr.f32.gmra.mrb[0].mxu0 %v30
    %v777 = vpop.f32.mrb[0].mxu0
    %v778 = vadd.f32 %v692, %v777
    %v779 = vpop.f32.mrb[0].mxu0
    %v780 = vadd.f32 %v696, %v779
    %781 = vmatprep.mubr.f32.mxu0 %v37
    %782 = vmatmul.mubr.f32.gmra.mrb[0].mxu0 %v36
    %v783 = vpop.f32.mrb[0].mxu0
    %v784 = vadd.f32 %v692, %v783
    %v785 = vpop.f32.mrb[0].mxu0
    %v786 = vadd.f32 %v696, %v785
    %787 = vmatprep.mubr.f32.mxu0 %v43
    %788 = vmatmul.mubr.f32.gmra.mrb[0].mxu0 %v42
    %v789 = vpop.f32.mrb[0].mxu0
    %v790 = vadd.f32 %v692, %v789
    %v791 = vpop.f32.mrb[0].mxu0
    %v792 = vadd.f32 %v696, %v791
    %793 = vdwg.mxu0
    %794 = vmatprep.subr.mxu0 %v582
    %795 = vmatpush1.msra.mxu0 %v581
    %796 = vmatprep.subr.mxu0 %v584
    %797 = vmatpush1.msra.mxu0 %v583
    %798 = vmatprep.subr.mxu0 %v586
    %799 = vmatpush1.msra.mxu0 %v585
    %800 = vmatprep.subr.mxu0 %v588
    %801 = vmatpush1.msra.mxu0 %v587
    %802 = vmatprep.subr.mxu0 %v590
    %803 = vmatpush1.msra.mxu0 %v589
    %804 = vmatprep.subr.mxu0 %v592
    %805 = vmatpush1.msra.mxu0 %v591
    %806 = vmatprep.subr.mxu0 %v594
    %807 = vmatpush1.msra.mxu0 %v593
    %808 = vmatprep.subr.mxu0 %v596
    %809 = vmatpush1.msra.mxu0 %v595
    %810 = vmatprep.subr.mxu0 %v598
    %811 = vmatpush1.msra.mxu0 %v597
    %812 = vmatprep.subr.mxu0 %v600
    %813 = vmatpush1.msra.mxu0 %v599
    %814 = vmatprep.subr.mxu0 %v602
    %815 = vmatpush1.msra.mxu0 %v601
    %816 = vmatprep.subr.mxu0 %v604
    %817 = vmatpush1.msra.mxu0 %v603
    %818 = vmatprep.subr.mxu0 %v606
    %819 = vmatpush1.msra.mxu0 %v605
    %820 = vmatprep.subr.mxu0 %v608
    %821 = vmatpush1.msra.mxu0 %v607
    %822 = vmatprep.subr.mxu0 %v610
    %823 = vmatpush1.msra.mxu0 %v609
    %824 = vmatprep.subr.mxu0 %v612
    %825 = vmatpush1.msra.mxu0 %v611
    %826 = vmatprep.subr.mxu0 %v614
    %827 = vmatpush1.msra.mxu0 %v613
    %828 = vmatprep.subr.mxu0 %v616
    %829 = vmatpush1.msra.mxu0 %v615
    %830 = vmatprep.subr.mxu0 %v618
    %831 = vmatpush1.msra.mxu0 %v617
    %832 = vmatprep.subr.mxu0 %v620
    %833 = vmatpush1.msra.mxu0 %v619
    %834 = vmatprep.subr.mxu0 %v622
    %835 = vmatpush1.msra.mxu0 %v621
    %836 = vmatprep.subr.mxu0 %v624
    %837 = vmatpush1.msra.mxu0 %v623
    %838 = vmatprep.subr.mxu0 %v626
    %839 = vmatpush1.msra.mxu0 %v625
    %840 = vmatprep.subr.mxu0 %v628
    %841 = vmatpush1.msra.mxu0 %v627
    %842 = vmatprep.subr.mxu0 %v630
    %843 = vmatpush1.msra.mxu0 %v629
    %844 = vmatprep.subr.mxu0 %v632
    %845 = vmatpush1.msra.mxu0 %v631
    %846 = vmatprep.subr.mxu0 %v634
    %847 = vmatpush1.msra.mxu0 %v633
    %848 = vmatprep.subr.mxu0 %v636
    %849 = vmatpush1.msra.mxu0 %v635
    %850 = vmatprep.subr.mxu0 %v638
    %851 = vmatpush1.msra.mxu0 %v637
    %852 = vmatprep.subr.mxu0 %v640
    %853 = vmatpush1.msra.mxu0 %v639
    %854 = vmatprep.subr.mxu0 %v642
    %855 = vmatpush1.msra.mxu0 %v641
    %856 = vmatprep.subr.mxu0 %v644
    %857 = vmatpush1.msra.mxu0 %v643
    %858 = vmatprep.mubr.f32.mxu0 %v27
    %859 = vmatmul.mubr.f32.gmra.mrb[0].mxu0 %v26
    %v860 = vpop.f32.mrb[0].mxu0
    %v861 = vadd.f32 %v772, %v860
    %v862 = vpop.f32.mrb[0].mxu0
    %v863 = vadd.f32 %v774, %v862
    %864 = vmatprep.mubr.f32.mxu0 %v33
    %865 = vmatmul.mubr.f32.gmra.mrb[0].mxu0 %v32
    %v866 = vpop.f32.mrb[0].mxu0
    %v867 = vadd.f32 %v778, %v866
    %v868 = vpop.f32.mrb[0].mxu0
    %v869 = vadd.f32 %v780, %v868
    %870 = vmatprep.mubr.f32.mxu0 %v39
    %871 = vmatmul.mubr.f32.gmra.mrb[0].mxu0 %v38
    %v872 = vpop.f32.mrb[0].mxu0
    %v873 = vadd.f32 %v784, %v872
    %v874 = vpop.f32.mrb[0].mxu0
    %v875 = vadd.f32 %v786, %v874
    %876 = vmatprep.mubr.f32.mxu0 %v45
    %877 = vmatmul.mubr.f32.gmra.mrb[0].mxu0 %v44
    %v878 = vpop.f32.mrb[0].mxu0
    %v879 = vadd.f32 %v790, %v878
    %v880 = vpop.f32.mrb[0].mxu0
    %v881 = vadd.f32 %v792, %v880
    %882 = vdwg.mxu0
    %883 = vmatprep.subr.mxu0 %v646
    %884 = vmatpush1.msra.mxu0 %v645
    %885 = vmatprep.subr.mxu0 %v648
    %886 = vmatpush1.msra.mxu0 %v647
    %887 = vmatprep.subr.mxu0 %v650
    %888 = vmatpush1.msra.mxu0 %v649
    %889 = vmatprep.subr.mxu0 %v652
    %890 = vmatpush1.msra.mxu0 %v651
    %891 = vmatprep.subr.mxu0 %v654
    %892 = vmatpush1.msra.mxu0 %v653
    %893 = vmatprep.subr.mxu0 %v656
    %894 = vmatpush1.msra.mxu0 %v655
    %895 = vmatprep.subr.mxu0 %v658
    %896 = vmatpush1.msra.mxu0 %v657
    %897 = vmatprep.subr.mxu0 %v660
    %898 = vmatpush1.msra.mxu0 %v659
    %899 = vmatprep.subr.mxu0 %v662
    %900 = vmatpush1.msra.mxu0 %v661
    %901 = vmatprep.subr.mxu0 %v664
    %902 = vmatpush1.msra.mxu0 %v663
    %903 = vmatprep.subr.mxu0 %v666
    %904 = vmatpush1.msra.mxu0 %v665
    %905 = vmatprep.subr.mxu0 %v668
    %906 = vmatpush1.msra.mxu0 %v667
    %907 = vmatprep.subr.mxu0 %v670
    %908 = vmatpush1.msra.mxu0 %v669
    %909 = vmatprep.subr.mxu0 %v672
    %910 = vmatpush1.msra.mxu0 %v671
    %911 = vmatprep.subr.mxu0 %v674
    %912 = vmatpush1.msra.mxu0 %v673
    %913 = vmatprep.subr.mxu0 %v676
    %914 = vmatpush1.msra.mxu0 %v675
    %915 = vmatprep.subr.mxu0 %v678
    %916 = vmatpush1.msra.mxu0 %v677
    %917 = vmatprep.subr.mxu0 %v680
    %918 = vmatpush1.msra.mxu0 %v679
    %919 = vmatprep.subr.mxu0 %v682
    %920 = vmatpush1.msra.mxu0 %v681
    %921 = vmatprep.subr.mxu0 %v684
    %922 = vmatpush1.msra.mxu0 %v683
    %923 = vmatprep.subr.mxu0 %v703
    %924 = vmatpush1.msra.mxu0 %v700
    %925 = vmatprep.subr.mxu0 0.0
    %926 = vmatpush1.msra.mxu0 0.0
    %927 = vmatprep.subr.mxu0 0.0
    %928 = vmatpush1.msra.mxu0 0.0
    %929 = vmatprep.subr.mxu0 0.0
    %930 = vmatpush1.msra.mxu0 0.0
    %931 = vmatprep.subr.mxu0 0.0
    %932 = vmatpush1.msra.mxu0 0.0
    %933 = vmatprep.subr.mxu0 0.0
    %934 = vmatpush1.msra.mxu0 0.0
    %935 = vmatprep.subr.mxu0 0.0
    %936 = vmatpush1.msra.mxu0 0.0
    %937 = vmatprep.subr.mxu0 0.0
    %938 = vmatpush1.msra.mxu0 0.0
    %939 = vmatprep.subr.mxu0 0.0
    %940 = vmatpush1.msra.mxu0 0.0
    %941 = vmatprep.subr.mxu0 0.0
    %942 = vmatpush1.msra.mxu0 0.0
    %943 = vmatprep.subr.mxu0 0.0
    %944 = vmatpush1.msra.mxu0 0.0
    %945 = vmatprep.subr.mxu0 0.0
    %946 = vmatpush1.msra.mxu0 0.0
    %947 = vmatprep.mubr.f32.mxu0 %v232
    %948 = vmatmul.mubr.f32.gmra.mrb[0].mxu0 %v28
    %v949 = vpop.f32.mrb[0].mxu0
    %v950 = vadd.f32 %v861, %v949
    %v951 = vpop.f32.mrb[0].mxu0
    %v952 = vadd.f32 %v863, %v951
    %953 = vmatprep.mubr.f32.mxu0 %v235
    %954 = vmatmul.mubr.f32.gmra.mrb[0].mxu0 %v34
    %v955 = vpop.f32.mrb[0].mxu0
    %v956 = vadd.f32 %v867, %v955
    %v957 = vpop.f32.mrb[0].mxu0
    %v958 = vadd.f32 %v869, %v957
    %959 = vmatprep.mubr.f32.mxu0 %v238
    %960 = vmatmul.mubr.f32.gmra.mrb[0].mxu0 %v40
    %v961 = vpop.f32.mrb[0].mxu0
    %v962 = vadd.f32 %v873, %v961
    %v963 = vpop.f32.mrb[0].mxu0
    %v964 = vadd.f32 %v875, %v963
    %965 = vmatprep.mubr.f32.mxu0 %v241
    %966 = vmatmul.mubr.f32.gmra.mrb[0].mxu0 %v46
    %v967 = vpop.f32.mrb[0].mxu0
    %v968 = vadd.f32 %v879, %v967
    %v969 = vpop.f32.mrb[0].mxu0
    %v970 = vadd.f32 %v881, %v969
    %971 = vdwg.mxu0
    %v972 = vmax.f32 %v495, %v950
    %v973 = vmax.f32 %v497, %v952
    %v974 = vmax.f32 %v501, %v956
    %v975 = vmax.f32 %v503, %v958
    %v976 = vmax.f32 %v507, %v962
    %v977 = vmax.f32 %v509, %v964
    %v978 = vmax.f32 %v513, %v968
    %v979 = vmax.f32 %v515, %v970
    %v980 = vld [vmem:[%s5] sm:$0xff]
    %v981 = vld [vmem:[%s5 + $0x8] sm:$0xff]
    %v982 = vld [vmem:[%s5 + $0x10] sm:$0xff]
    %v983 = vld [vmem:[%s5 + $0x18] sm:$0xff]
    %v984 = vld [vmem:[%s5 + $0x20] sm:$0xff]
    %v985 = vld [vmem:[%s5 + $0x28] sm:$0xff]
    %v986 = vld [vmem:[%s5 + $0x30] sm:$0xff]
    %v987 = vld [vmem:[%s5 + $0x38] sm:$0xff]
    %v988 = vmul.f32 %v972, %v980
    %v989 = vmul.f32 %v973, %v981
    %v990 = vmul.f32 %v974, %v982
    %v991 = vmul.f32 %v975, %v983
    %v992 = vmul.f32 %v976, %v984
    %v993 = vmul.f32 %v977, %v985
    %v994 = vmul.f32 %v978, %v986
    %v995 = vmul.f32 %v979, %v987
    %996 = vst [vmem:[#allocation2] sm:$0xff] %v988
    %vm997 = vcmask 261120
    %998 = vst.msk [vmem:[#allocation2 + $0x8] sm:$0xff] %vm997, %v989
    %999 = vst [vmem:[#allocation2 + $0x10] sm:$0xff] %v990
    %1000 = vst.msk [vmem:[#allocation2 + $0x18] sm:$0xff] %vm997, %v991
    %1001 = vst [vmem:[#allocation2 + $0x20] sm:$0xff] %v992
    %1002 = vst.msk [vmem:[#allocation2 + $0x28] sm:$0xff] %vm997, %v993
    %1003 = vst [vmem:[#allocation2 + $0x30] sm:$0xff] %v994
    %1004 = vst.msk [vmem:[#allocation2 + $0x38] sm:$0xff] %vm997, %v995
    // Predicated region
    $region26: #{tpu_custom_call.1} parent=1 // pred_check
      _
    $region27: #{tpu_custom_call.1} parent=1 // pred_check_branch
      %1006 = sbr.rel (0) target = $region29
    $region28: #{tpu_custom_call.1} parent=1 // pred_region
      %s1008 = ssub.s32 1024, 1024
      %1009 = vsyncadd [#allocation3], %s1008
      %s1010 = sshll.u32 [#allocation2], 4
      %s1011 = int_to_ptr.vmem [resolvable:$true] %s1010
      %1016 = dma.vmem_to_hbm [thread:$0]  %s1011, 1024, %s6, [#allocation3], 256, 256, 16
    $region29: #{tpu_custom_call.1} parent=1 // pred_fallthru
      _
    // Predicated region
    $region30: #{tpu_custom_call.1} parent=1 // pred_check
      _
    $region31: #{tpu_custom_call.1} parent=1 // pred_check_branch
      %1018 = sbr.rel (0) target = $region33
    $region32: #{tpu_custom_call.1} parent=1 // pred_region
      %1019 = dma.done [#allocation3], 1024
    $region33: #{tpu_custom_call.1} parent=1 // pred_fallthru
      _
    %1020 = vsyncpa [#allocation3], 1

</llo_original>
